<compile_context>
chip_gen: v5e
topology: v5e:2x2
jax: 0.10.0
libtpu: 0.0.40
codegen_flags: <defaults>
</compile_context>

<pallas_src>
import math

import jax
import jax.numpy as jnp
from jax.experimental import pallas as pl
from jax.experimental.pallas import tpu as pltpu


def gaussian_sample_kernel(x_ref, w_ref, b_ref, eps_ref, out_ref):
    out = eps_ref.shape[-1]

    # Fused matmul on the MXU: (TB, in) @ (in, 2*out), f32 accumulation.
    y = jnp.dot(x_ref[...], w_ref[...],
                preferred_element_type=jnp.float32) + b_ref[...]
    mu = y[:, :out]
    lv_pre = y[:, out:]

    # Stable softplus + std sharing one exp (threshold matches F.softplus).
    big = lv_pre > 20.0
    e = jnp.exp(jnp.minimum(lv_pre, 20.0))
    log_var = jnp.where(big, lv_pre, jnp.log1p(e))
    std = jnp.where(big, jnp.exp(0.5 * lv_pre), jnp.sqrt(1.0 + e))

    # z = mu + std * eps   (torch addcmul semantics)
    z = mu + std * eps_ref[...]

    # Single lane-dense store: [z | mu | log_var] packed along the lane axis.
    out_ref[...] = jnp.concatenate([z, mu, log_var], axis=-1).astype(out_ref.dtype)


def gaussian_sample(x, w_mu, b_mu, w_lv, b_lv, eps, *, block_b=512):
    """x: (B, in), w_*: (in, out), b_*: (1, out), eps: (B, out)."""
    B, in_features = x.shape
    out_features = w_mu.shape[1]

    # Fuse the two linear layers into one (in, 2*out) weight / (1, 2*out) bias.
    w = jnp.concatenate([w_mu, w_lv], axis=1)
    b = jnp.concatenate([b_mu, b_lv], axis=1)

    # Batch tile: multiple of 8 sublanes (or the whole batch when it is small).
    # Kept modest so double-buffered x/eps/out blocks fit v7x's 64 MiB VMEM.
    tb = B if B <= block_b else max(8, (block_b // 8) * 8)
    pad = (-B) % tb
    if pad:
        x = jnp.pad(x, ((0, pad), (0, 0)))
        eps = jnp.pad(eps, ((0, pad), (0, 0)))
    bp = B + pad

    packed = pl.pallas_call(
        gaussian_sample_kernel,
        out_shape=jax.ShapeDtypeStruct((bp, 3 * out_features), jnp.float32),
        grid=(pl.cdiv(bp, tb),),
        in_specs=[
            pl.BlockSpec((tb, in_features), lambda i: (i, 0)),               # x (streamed)
            pl.BlockSpec((in_features, 2 * out_features), lambda i: (0, 0)), # fused W (resident)
            pl.BlockSpec((1, 2 * out_features), lambda i: (0, 0)),           # fused bias (resident)
            pl.BlockSpec((tb, out_features), lambda i: (i, 0)),              # eps (streamed)
        ],
        out_specs=pl.BlockSpec((tb, 3 * out_features), lambda i: (i, 0)),
        compiler_params=pltpu.CompilerParams(
            dimension_semantics=("parallel",),      # v7x: shard batch over both TCs
            vmem_limit_bytes=48 * 1024 * 1024,      # stay under v7x's 64 MiB VMEM
        ),
    )(x, w, b, eps)

    packed = packed[:B]
    z = packed[:, :out_features]
    mu = packed[:, out_features:2 * out_features]
    log_var = packed[:, 2 * out_features:]
    return z, mu, log_var


def init_linear_params(key, in_features, out_features):
    """Deterministic init matching nn.Linear's default (Kaiming-uniform-ish)."""
    k_w, k_b = jax.random.split(key)
    bound = 1.0 / math.sqrt(in_features)
    # Stored as (in, out): already transposed relative to PyTorch's (out, in).
    w = jax.random.uniform(k_w, (in_features, out_features), jnp.float32,
                           minval=-bound, maxval=bound)
    b = jax.random.uniform(k_b, (1, out_features), jnp.float32,
                           minval=-bound, maxval=bound)
    return w, b


if __name__ == "__main__":
    in_features = 32
    out_features = 16
    batch = 8

    root = jax.random.PRNGKey(0)
    k_x, k_mu, k_lv, k_eps = jax.random.split(root, 4)

    x = jax.random.normal(k_x, (batch, in_features), jnp.float32)
    w_mu, b_mu = init_linear_params(k_mu, in_features, out_features)
    w_lv, b_lv = init_linear_params(k_lv, in_features, out_features)
    eps = jax.random.normal(k_eps, (batch, out_features), jnp.float32)

    z, mu, log_var = gaussian_sample(x, w_mu, b_mu, w_lv, b_lv, eps)
    jax.block_until_ready((z, mu, log_var))

    # Reference check in plain JAX.
    mu_ref = x @ w_mu + b_mu
    lv_ref = jax.nn.softplus(x @ w_lv + b_lv)
    z_ref = mu_ref + jnp.exp(0.5 * lv_ref) * eps
    assert jnp.allclose(mu, mu_ref, atol=1e-5)
    assert jnp.allclose(log_var, lv_ref, atol=1e-5)
    assert jnp.allclose(z, z_ref, atol=1e-5)

    print("KERNEL_OK")
</pallas_src>

<mosaic_0001>
module attributes {stable_mosaic.version = 11 : i64} {
  func.func @gaussian_sample_kernel(%arg0: i32, %arg1: memref<8x32xf32, #tpu.memory_space<vmem>>, %arg2: memref<32x32xf32, #tpu.memory_space<vmem>>, %arg3: memref<1x32xf32, #tpu.memory_space<vmem>>, %arg4: memref<8x16xf32, #tpu.memory_space<vmem>>, %arg5: memref<8x48xf32, #tpu.memory_space<vmem>>) attributes {dimension_semantics = [#tpu.dimension_semantics<parallel>], iteration_bounds = array<i64: 1>, scalar_prefetch = 0 : i64, scratch_operands = 0 : i64, tpu.core_type = #tpu.core_type<tc>, window_params = [{transform_indices = @transform_0, window_bounds = array<i64: 8, 32>}, {pipeline_mode = #tpu.pipeline_mode<synchronous>, transform_indices = @transform_1, window_bounds = array<i64: 32, 32>}, {pipeline_mode = #tpu.pipeline_mode<synchronous>, transform_indices = @transform_2, window_bounds = array<i64: 1, 32>}, {transform_indices = @transform_3, window_bounds = array<i64: 8, 16>}, {transform_indices = @transform_4, window_bounds = array<i64: 8, 48>}]} {
    %c0 = arith.constant 0 : index
    %c0_0 = arith.constant 0 : index
    %0 = vector.load %arg1[%c0, %c0_0] : memref<8x32xf32, #tpu.memory_space<vmem>>, vector<8x32xf32>
    %c0_1 = arith.constant 0 : index
    %c0_2 = arith.constant 0 : index
    %1 = vector.load %arg2[%c0_1, %c0_2] : memref<32x32xf32, #tpu.memory_space<vmem>>, vector<32x32xf32>
    %cst = arith.constant dense<0.000000e+00> : vector<8x32xf32>
    %2 = tpu.matmul %0, %1, %cst {dimension_numbers = #tpu.dot_dimension_numbers<[1], [0], [0], [1], [0, 0, 1, 1], [], []>} : vector<8x32xf32>, vector<32x32xf32>, vector<8x32xf32> -> vector<8x32xf32>
    %c0_3 = arith.constant 0 : index
    %c0_4 = arith.constant 0 : index
    %3 = vector.load %arg3[%c0_3, %c0_4] : memref<1x32xf32, #tpu.memory_space<vmem>>, vector<1x32xf32>
    %4 = vector.broadcast %3 : vector<1x32xf32> to vector<8x32xf32>
    %5 = arith.addf %2, %4 : vector<8x32xf32>
    %6 = vector.extract_strided_slice %5 {offsets = [0, 0], sizes = [8, 16], strides = [1, 1]} : vector<8x32xf32> to vector<8x16xf32>
    %7 = vector.extract_strided_slice %5 {offsets = [0, 16], sizes = [8, 16], strides = [1, 1]} : vector<8x32xf32> to vector<8x16xf32>
    %cst_5 = arith.constant 2.000000e+01 : f32
    %8 = vector.broadcast %cst_5 : f32 to vector<8x16xf32>
    %9 = arith.cmpf ogt, %7, %8 : vector<8x16xf32>
    %cst_6 = arith.constant 2.000000e+01 : f32
    %10 = vector.broadcast %cst_6 : f32 to vector<8x16xf32>
    %11 = arith.minimumf %7, %10 : vector<8x16xf32>
    %12 = math.exp %11 : vector<8x16xf32>
    %13 = math.log1p %12 : vector<8x16xf32>
    %14 = arith.select %9, %7, %13 : vector<8x16xi1>, vector<8x16xf32>
    %cst_7 = arith.constant 5.000000e-01 : f32
    %15 = vector.broadcast %cst_7 : f32 to vector<8x16xf32>
    %16 = arith.mulf %15, %7 : vector<8x16xf32>
    %17 = math.exp %16 : vector<8x16xf32>
    %cst_8 = arith.constant 1.000000e+00 : f32
    %18 = vector.broadcast %cst_8 : f32 to vector<8x16xf32>
    %19 = arith.addf %18, %12 : vector<8x16xf32>
    %20 = math.sqrt %19 : vector<8x16xf32>
    %21 = arith.select %9, %17, %20 : vector<8x16xi1>, vector<8x16xf32>
    %c0_9 = arith.constant 0 : index
    %c0_10 = arith.constant 0 : index
    %22 = vector.load %arg4[%c0_9, %c0_10] : memref<8x16xf32, #tpu.memory_space<vmem>>, vector<8x16xf32>
    %23 = arith.mulf %21, %22 : vector<8x16xf32>
    %24 = arith.addf %6, %23 : vector<8x16xf32>
    %25 = tpu.concatenate %24, %6, %14 in 1 : vector<8x16xf32>, vector<8x16xf32>, vector<8x16xf32> -> vector<8x48xf32>
    %c0_11 = arith.constant 0 : index
    %c0_12 = arith.constant 0 : index
    %26 = vector.load %arg5[%c0_11, %c0_12] : memref<8x48xf32, #tpu.memory_space<vmem>>, vector<8x48xf32>
    tpu.vector_store %arg5[%c0_11, %c0_12], %25 {strides = array<i32>} : memref<8x48xf32, #tpu.memory_space<vmem>>, vector<8x48xf32>,
    return
  }
  func.func @transform_0(%arg0: i32) -> (i32, i32) {
    %c0_i32 = arith.constant 0 : i32
    %c0_i32_0 = arith.constant 0 : i32
    return %arg0, %c0_i32 : i32, i32
  }
  func.func @transform_1(%arg0: i32) -> (i32, i32) {
    %c0_i32 = arith.constant 0 : i32
    %c0_i32_0 = arith.constant 0 : i32
    %c0_i32_1 = arith.constant 0 : i32
    return %c0_i32, %c0_i32_0 : i32, i32
  }
  func.func @transform_2(%arg0: i32) -> (i32, i32) {
    %c0_i32 = arith.constant 0 : i32
    %c0_i32_0 = arith.constant 0 : i32
    %c0_i32_1 = arith.constant 0 : i32
    return %c0_i32, %c0_i32_0 : i32, i32
  }
  func.func @transform_3(%arg0: i32) -> (i32, i32) {
    %c0_i32 = arith.constant 0 : i32
    %c0_i32_0 = arith.constant 0 : i32
    return %arg0, %c0_i32 : i32, i32
  }
  func.func @transform_4(%arg0: i32) -> (i32, i32) {
    %c0_i32 = arith.constant 0 : i32
    %c0_i32_0 = arith.constant 0 : i32
    return %arg0, %c0_i32 : i32, i32
  }
}

</mosaic_0001>

<llo_original>
// kernel: tpu_custom_call.1
$region0: #{tpu_custom_call.1}
  #allocation0 [shape = 'u32[]', space=smem, size = 0x4, offset = 0x4, fixed_abs, tag = 'smem constant byte address 0x4 - core index']
  #allocation1 [shape = 'u32[72,128]{1,0:T(1,128)}', space=vmem, size = 0x9000, scoped, tag = 'internal scratch']
  %s0 = inlined_call_operand.hbm [shape: f32[8,32], index: 0, kind: input, shape index: {}]
  %s1 = inlined_call_operand.hbm [shape: f32[32,32], index: 1, kind: input, shape index: {}]
  %s2 = inlined_call_operand.vmem [shape: f32[1,32], index: 2, kind: input, shape index: {}]
  %s3 = inlined_call_operand.hbm [shape: f32[8,16], index: 3, kind: input, shape index: {}]
  %s4 = inlined_call_operand.hbm [shape: f32[8,48], index: 4, kind: output, shape index: {}]
  %s5 = sld [smem:[#allocation0]]
  $region38: #{tpu_custom_call.1} parent=0
    _
  %s7 = ssub.s32 1, %s5
  %s8 = scalar_select 0, %s7, %s5
  $region1: #{tpu_custom_call.1} parent=0
    #allocation2 [shape = 'u8[4096]{0}', space=vmem, size = 0x1000, scoped, tag = 'input window, operand 0, single buffered']
    #allocation3 [shape = 's32[1]{0}', space=sflag, size = 0x4, scoped, tag = 'scoped memory for tpu_custom_call.1']
    #allocation4 [shape = 's32[1]{0}', space=sflag, size = 0x4, scoped, tag = 'scoped memory for tpu_custom_call.1']
    #allocation5 [shape = 'u8[16384]{0}', space=vmem, size = 0x4000, scoped, tag = 'input window, operand 1, single buffered']
    #allocation6 [shape = 's32[1]{0}', space=sflag, size = 0x4, scoped, tag = 'scoped memory for tpu_custom_call.1']
    #allocation7 [shape = 'u8[4096]{0}', space=vmem, size = 0x1000, scoped, tag = 'input window, operand 3, single buffered']
    #allocation8 [shape = 'u8[4096]{0}', space=vmem, size = 0x1000, scoped, tag = 'output window, operand 0, single buffered']
    %9 = vsyncpa [#allocation3], 0
    %10 = vsyncpa [#allocation6], 0
    %11 = vsyncpa [#allocation4], 0
    // Predicated region
    $region2: #{tpu_custom_call.1} parent=1 // pred_check
      _
    $region3: #{tpu_custom_call.1} parent=1 // pred_check_branch
      %13 = sbr.rel (0) target = $region5
    $region4: #{tpu_custom_call.1} parent=1 // pred_region
      %15 = vsyncadd [#allocation3], 0
      %s17 = sshll.u32 %s0, 4
      %s18 = int_to_ptr.hbm [resolvable:$true] %s17
      %s19 = sshll.u32 [#allocation2], 4
      %s20 = int_to_ptr.vmem [resolvable:$true] %s19
      %22 = dma.hbm_to_vmem [thread:$0]  %s18, 128, %s20, [#allocation3]
    $region5: #{tpu_custom_call.1} parent=1 // pred_fallthru
      _
    // Predicated region
    $region6: #{tpu_custom_call.1} parent=1 // pred_check
      _
    $region7: #{tpu_custom_call.1} parent=1 // pred_check_branch
      %24 = sbr.rel (0) target = $region9
    $region8: #{tpu_custom_call.1} parent=1 // pred_region
      %26 = vsyncadd [#allocation6], 0
      %s27 = sshll.u32 %s1, 4
      %s28 = int_to_ptr.hbm [resolvable:$true] %s27
      %s29 = sshll.u32 [#allocation5], 4
      %s30 = int_to_ptr.vmem [resolvable:$true] %s29
      %35 = dma.hbm_to_vmem [thread:$0]  %s28, 512, %s30, [#allocation6], 128, 128, 8
    $region9: #{tpu_custom_call.1} parent=1 // pred_fallthru
      _
    // Predicated region
    $region10: #{tpu_custom_call.1} parent=1 // pred_check
      _
    $region11: #{tpu_custom_call.1} parent=1 // pred_check_branch
      %37 = sbr.rel (0) target = $region13
    $region12: #{tpu_custom_call.1} parent=1 // pred_region
      _
    $region13: #{tpu_custom_call.1} parent=1 // pred_fallthru
      _
    // Predicated region
    $region14: #{tpu_custom_call.1} parent=1 // pred_check
      _
    $region15: #{tpu_custom_call.1} parent=1 // pred_check_branch
      %39 = sbr.rel (0) target = $region17
    $region16: #{tpu_custom_call.1} parent=1 // pred_region
      %41 = vsyncadd [#allocation6], 0
      %s43 = sshll.u32 %s3, 4
      %s44 = int_to_ptr.hbm [resolvable:$true] %s43
      %s45 = sshll.u32 [#allocation7], 4
      %s46 = int_to_ptr.vmem [resolvable:$true] %s45
      %48 = dma.hbm_to_vmem [thread:$0]  %s44, 128, %s46, [#allocation6]
    $region17: #{tpu_custom_call.1} parent=1 // pred_fallthru
      _
    // Predicated region
    $region18: #{tpu_custom_call.1} parent=1 // pred_check
      _
    $region19: #{tpu_custom_call.1} parent=1 // pred_check_branch
      %50 = sbr.rel (0) target = $region21
    $region20: #{tpu_custom_call.1} parent=1 // pred_region
      %52 = dma.done [#allocation3], 128
    $region21: #{tpu_custom_call.1} parent=1 // pred_fallthru
      _
    // Predicated region
    $region22: #{tpu_custom_call.1} parent=1 // pred_check
      _
    $region23: #{tpu_custom_call.1} parent=1 // pred_check_branch
      %54 = sbr.rel (0) target = $region25
    $region24: #{tpu_custom_call.1} parent=1 // pred_region
      %56 = dma.done [#allocation6], 512
    $region25: #{tpu_custom_call.1} parent=1 // pred_fallthru
      _
    // Predicated region
    $region26: #{tpu_custom_call.1} parent=1 // pred_check
      _
    $region27: #{tpu_custom_call.1} parent=1 // pred_check_branch
      %58 = sbr.rel (0) target = $region29
    $region28: #{tpu_custom_call.1} parent=1 // pred_region
      %60 = dma.done [#allocation6], 128
    $region29: #{tpu_custom_call.1} parent=1 // pred_fallthru
      _
    %v61 = vld [vmem:[#allocation2] sm:$0xff]
    %v62 = vld [vmem:[#allocation5] sm:$0xff]
    %v63 = vld [vmem:[#allocation5 + $0x8] sm:$0xff]
    %v64 = vld [vmem:[#allocation5 + $0x10] sm:$0xff]
    %v65 = vld [vmem:[#allocation5 + $0x18] sm:$0xff]
    %v66 = vld [vmem:[%s2] sm:$0x1]
    %v68 = vperm.slane %v66, 0
    %vm70 = vcmask 261120
    %v72 = vsel %vm70, %v61, 0
    %74 = vmatpush.msra.mxu0 0.0
    %75 = vmatpush.msra.mxu0 0.0
    %76 = vmatpush.msra.mxu0 0.0
    %77 = vmatpush.msra.mxu0 0.0
    %78 = vmatpush.msra.mxu0 0.0
    %79 = vmatpush.msra.mxu0 0.0
    %80 = vmatpush.msra.mxu0 0.0
    %81 = vmatpush.msra.mxu0 0.0
    %82 = vmatpush.msra.mxu0 0.0
    %83 = vmatpush.msra.mxu0 0.0
    %84 = vmatpush.msra.mxu0 0.0
    %85 = vmatpush.msra.mxu0 0.0
    %86 = vmatpush.msra.mxu0 %v65
    %87 = vmatpush.msra.mxu0 %v64
    %88 = vmatpush.msra.mxu0 %v63
    %89 = vmatpush.msra.mxu0 %v62
    %90 = vmatmul.f32.gmra.mxu0 %v72
    %v91 = vpop.f32.mrf.mxu0
    %v92 = vadd.f32 %v68, %v91
    %93 = vdwg.mxu0
    %vm94 = vcmp.gt.f32.partialorder %v92, 20.0
    %v95 = vmin.f32 %v92, 20.0
    %v96 = vmul.f32 %v95, 1.442695
    %v97 = vpow.pop %v96
    %v98 = vadd.f32 %v97, 1.0
    %v99 = vlog2.pop %v98
    %v100 = vmul.f32 %v99, 0.6931472
    %v101 = vmul.f32 -0.5, %v97
    %v102 = vadd.f32 %v101, 1.0
    %v103 = vmul.f32 %v102, %v97
    %v104 = vand.u32 2147483647, %v97
    %vm105 = vcmp.lt.f32.partialorder %v104, 0.0004427343
    %v106 = vsel %vm105, %v103, %v100
    %v107 = vsel %vm94, %v92, %v106
    %v108 = vmul.f32 %v92, 0.5
    %v109 = vmul.f32 %v108, 1.442695
    %v110 = vpow.pop %v109
    %v111 = vadd.f32 %v97, 1.0
    %v112 = vrsqrt.pop %v111
    %v113 = vmul.f32 %v112, %v111
    %v114 = vmul.f32 %v113, %v112
    %v115 = vmul.f32 0.5, %v114
    %v116 = vsub.f32 1.5, %v115
    %v117 = vmul.f32 %v112, %v116
    %v118 = vmul.f32 %v111, %v117
    %vm119 = vcmp.eq.f32.partialorder %v111, inf
    %v120 = vsel %vm119, %v111, %v118
    %vm121 = vcmp.eq.f32.partialorder %v111, 0.0
    %v122 = vand.u32 %v111, 2147483648
    %v123 = vsel %vm121, %v122, %v120
    %v124 = vsel %vm94, %v110, %v123
    %v125 = vld [vmem:[#allocation7] sm:$0xff]
    %127 = vrot.lane.b32.xlu0 %v125, 16
    %v128 = vpop.permute.xlu0 %127
    %v130 = vmul.f32 %v124, %v128
    %132 = vrot.lane.b32.xlu0 %v130, 112
    %v133 = vpop.permute.xlu0 %132
    %v135 = vadd.f32 %v92, %v133
    %137 = vrot.lane.b32.xlu0 %v92, 16
    %v138 = vpop.permute.xlu0 %137
    %141 = vrot.lane.b32.xlu0 %v107, 16
    %v142 = vpop.permute.xlu0 %141
    %vm144 = vcmask 130048
    %v145 = vsel %vm144, %v135, %v138
    %v146 = vsel %vm70, %v145, %v142
    %vm147 = vcmask 392192
    %148 = vst.msk [vmem:[#allocation8] sm:$0xff] %vm147, %v146
    // Predicated region
    $region30: #{tpu_custom_call.1} parent=1 // pred_check
      _
    $region31: #{tpu_custom_call.1} parent=1 // pred_check_branch
      %150 = sbr.rel (0) target = $region33
    $region32: #{tpu_custom_call.1} parent=1 // pred_region
      %152 = vsyncadd [#allocation4], 0
      %s154 = sshll.u32 [#allocation8], 4
      %s155 = int_to_ptr.vmem [resolvable:$true] %s154
      %s156 = sshll.u32 %s4, 4
      %s157 = int_to_ptr.hbm [resolvable:$true] %s156
      %159 = dma.vmem_to_hbm [thread:$0]  %s155, 128, %s157, [#allocation4]
    $region33: #{tpu_custom_call.1} parent=1 // pred_fallthru
      _
    // Predicated region
    $region34: #{tpu_custom_call.1} parent=1 // pred_check
      _
    $region35: #{tpu_custom_call.1} parent=1 // pred_check_branch
      %161 = sbr.rel (0) target = $region37
    $region36: #{tpu_custom_call.1} parent=1 // pred_region
      %163 = dma.done [#allocation4], 128
    $region37: #{tpu_custom_call.1} parent=1 // pred_fallthru
      _
    %164 = vsyncpa [#allocation3], 1
    %165 = vsyncpa [#allocation6], 1
    %166 = vsyncpa [#allocation4], 1

</llo_original>
